<compile_context>
chip_gen: v5e
topology: v5e:2x2
jax: 0.10.0
libtpu: 0.0.40
codegen_flags: <defaults>
</compile_context>

<pallas_src>
import math
import numpy as np
import jax
import jax.numpy as jnp
from jax.experimental import pallas as pl
from jax.experimental.pallas import tpu as pltpu


def _round_up(x, m):
    return ((x + m - 1) // m) * m


def _glycan_embed_kernel(idx_ref, tbl_ref, pe_ref, out_ref):
    """One grid step: embed TILE_NP * PACK tokens, lane-dense packed output.

    idx_ref: (PACK, TILE_NP) int32 -- pre-biased ids (id + slot*Vp); PACK on
             sublanes, tokens lane-dense (no 32x lane inflation, contiguous DMA).
    tbl_ref: (KDIM, PACK*H) f32    -- block-diagonal replicated table, resident.
                                      KDIM = round_up(PACK*Vp, 128).
    pe_ref:  (1, PACK*H) f32       -- sinusoidal PE, tiled PACK times, resident.
    out_ref: (TILE_NP, PACK*H) f32
    """
    pack = idx_ref.shape[0]
    kdim = tbl_ref.shape[0]
    tile_np = out_ref.shape[0]

    idx = idx_ref[...]                                          # (PACK, TILE_NP)

    # Transposed one-hot with pure VPU compares: hit_t[j, r] == 1 iff the token in
    # lane r selects table row j.  Ids are pre-biased by +k*Vp in the wrapper, so the
    # PACK slots hit disjoint row ranges and an OR over slots covers everything.
    sub = jax.lax.broadcasted_iota(jnp.int32, (kdim, tile_np), 0)
    hit_t = sub == idx[0:1, :]
    for k in range(1, pack):
        hit_t = jnp.logical_or(hit_t, sub == idx[k:k + 1, :])

    # Fully (8,128)-aligned 32-bit transpose (KDIM, TILE_NP are multiples of 128),
    # then a standard MXU matmul.  One-hot rows select exact f32 table entries; the
    # compute is trivially hidden under the output DMA.
    hit = hit_t.astype(jnp.float32).T                           # (TILE_NP, KDIM)
    emb = jnp.dot(hit, tbl_ref[...], preferred_element_type=jnp.float32)

    out_ref[...] = emb + pe_ref[...]                            # full 128-lane stores


def prepare_glycan_embedding(params):
    """One-time preprocessing (hoisted out of the per-call wrapper, per review).

    Builds, for each embedding table, a block-diagonal f32 copy replicated PACK times
    (so the packed one-hot matmul emits PACK embeddings per 128-lane output row) and
    a cache for the per-pos_index sinusoidal PE row.
    """
    H = int(params["hidden_size"])
    if H % 2 != 0:
        raise ValueError(f"Cannot use sin/cos positional encoding with odd dim {H}")
    pack = 1 if H >= 128 else max(1, 128 // H)
    HP = pack * H

    def block_diag(table):
        t = np.asarray(table, dtype=np.float32)      # keep f32 (no bf16 weight cast)
        V, h = t.shape
        assert h == H, (h, H)
        vp = _round_up(V, 8)
        kdim = _round_up(pack * vp, 128)             # 128-aligned contraction dim
        out = np.zeros((kdim, HP), np.float32)
        for k in range(pack):
            out[k * vp:k * vp + V, k * H:(k + 1) * H] = t
        return jnp.asarray(out), V, vp, kdim

    return dict(
        H=H, pack=pack, HP=HP,
        tables={0: block_diag(params["tgt_token_embedding"]),    # even pos_index
                1: block_diag(params["idx_token_embedding"])},   # odd pos_index
        div_term=np.asarray(params["div_term"], dtype=np.float64),
        pe_cache={},
    )


def _pe_packed(prepared, pos_index):
    # torch: pos = ceil(pos_index / 2); pe = [sin(pos/div), cos(pos/div)] in f64 then
    # cast to f32.  Loop-invariant -> computed once per pos value and cached.
    p = float(math.ceil(pos_index / 2))
    pe = prepared["pe_cache"].get(p)
    if pe is None:
        ang = p / prepared["div_term"]                           # float64, as in torch
        pe_tok = np.concatenate([np.sin(ang), np.cos(ang)]).astype(np.float32)
        pe = jnp.asarray(np.tile(pe_tok, prepared["pack"])[None, :])   # (1, PACK*H)
        prepared["pe_cache"][p] = pe
    return pe


def glycan_token_embedding(tgt, pos_index, prepared, tile_np=4096):
    """JAX wrapper reproducing GlycanTokenEmbedding.forward(tgt, pos_index)."""
    B, S = tgt.shape
    H, pack, HP = prepared["H"], prepared["pack"], prepared["HP"]

    # Even pos_index -> tgt table, odd -> idx table (host Python control flow on the
    # scalar pos_index, exactly like the torch module).
    tbl, V, vp, kdim = prepared["tables"][int(pos_index) % 2]

    pe_packed = _pe_packed(prepared, pos_index)                  # cached per pos

    N = B * S
    NP = -(-N // pack)                                           # packed output rows

    # Balanced, 128-aligned tiling.  The kernel is output-HBM-write / step-overhead
    # bound, so tiles are big by default (tile_np=4096 -> 2 MB f32 output tile; use
    # 8192 on v7x), shrink for tiny inputs, and re-balance so padding waste stays
    # below 128 rows per grid step (keeps v5e-friendly, keeps grid >= 2 when N is big
    # enough for the megacore split).
    tile_np = _round_up(max(128, min(tile_np, NP)), 128)
    steps = -(-NP // tile_np)
    tile_np = _round_up(-(-NP // steps), 128)
    NP_pad = _round_up(NP, tile_np)
    grid = (NP_pad // tile_np,)

    # Token ids: flatten, clamp (defensive vs. torch's hard error on OOB ids), pad,
    # pre-bias with +slot*Vp, and lay out (PACK, NP_pad) so the id tile is lane-dense.
    idx_flat = jnp.clip(tgt.reshape(-1).astype(jnp.int32), 0, V - 1)
    n_pad = NP_pad * pack - N
    if n_pad:
        idx_flat = jnp.pad(idx_flat, (0, n_pad))
    idx = (idx_flat.reshape(NP_pad, pack)
           + jnp.arange(pack, dtype=jnp.int32)[None, :] * vp).T          # (PACK, NP_pad)

    # VMEM @ tile_np=4096: out 2x2MB + idx 2x128KB + tbl 2x64KB + intermediates,
    # comfortably under the 32 MiB limit on v5e/v6e/v7x.
    out = pl.pallas_call(
        _glycan_embed_kernel,
        out_shape=jax.ShapeDtypeStruct((NP_pad, HP), jnp.float32),
        grid=grid,
        in_specs=[
            pl.BlockSpec((pack, tile_np), lambda i: (0, i)),   # ids: lane-dense tiles
            pl.BlockSpec((kdim, HP), lambda i: (0, 0)),        # table: resident
            pl.BlockSpec((1, HP), lambda i: (0, 0)),           # PE: resident
        ],
        out_specs=pl.BlockSpec((tile_np, HP), lambda i: (i, 0)),
        compiler_params=pltpu.CompilerParams(
            dimension_semantics=("parallel",),       # shard grid over v7x's 2 TCs
            vmem_limit_bytes=32 * 1024 * 1024,
        ),
    )(idx, tbl, pe_packed)

    # Packed (NP_pad, PACK*H) row-major == (NP_pad*PACK, H) row-major.
    out = out.reshape(NP_pad * pack, H)[:N]
    return out.reshape(B, S, H)


def _reference(tgt, pos_index, params):
    """Plain-JAX/NumPy reference of the same forward pass (f32 tables, f64 PE)."""
    if pos_index % 2 == 0:
        table = params["tgt_token_embedding"]
    else:
        table = params["idx_token_embedding"]
    emb = table[tgt]                                             # (B, S, H)
    p = float(math.ceil(pos_index / 2))
    div = np.asarray(params["div_term"], dtype=np.float64)
    ang = p / div
    pe = np.concatenate([np.sin(ang), np.cos(ang)]).astype(np.float32)
    return emb + jnp.asarray(pe)


if __name__ == "__main__":
    key = jax.random.PRNGKey(0)
    hidden_size, max_len, aa_dict_size = 32, 16, 12
    B, S = 2, 8

    k1, k2, k3 = jax.random.split(key, 3)
    # nn.Embedding default init: N(0, 1)
    tgt_table = jax.random.normal(k1, (aa_dict_size, hidden_size), jnp.float32)
    idx_table = jax.random.normal(k2, (max_len, hidden_size), jnp.float32)

    # SinusoidalPositionEmbedding buffer, kept in float64 like the torch module.
    base = 10000.0 / (2.0 * np.pi)
    scale = 1e-5 / 10000.0
    div_term = base * scale ** (np.arange(0, hidden_size, 2, dtype=np.float64)
                                / hidden_size)

    params = dict(
        hidden_size=hidden_size,
        tgt_token_embedding=tgt_table,
        idx_token_embedding=idx_table,
        div_term=div_term,
    )
    prepared = prepare_glycan_embedding(params)   # one-time table / PE-cache setup

    tgt = jax.random.randint(k3, (B, S), 0, min(aa_dict_size, max_len),
                             dtype=jnp.int32)

    # Exercise both branches: even pos_index -> tgt table, odd -> idx table.
    for pos_index in (4, 5):
        out = glycan_token_embedding(tgt, pos_index, prepared)
        out = jax.block_until_ready(out)
        ref = _reference(tgt, pos_index, params)
        # f32 tables + exact one-hot gather: error limited only by the MXU's f32
        # pass configuration (typically far below this tolerance).
        np.testing.assert_allclose(np.asarray(out), np.asarray(ref),
                                   rtol=1e-2, atol=1e-2)

    print("KERNEL_OK")
</pallas_src>

<mosaic_0001>
module attributes {stable_mosaic.version = 11 : i64} {
  func.func @_glycan_embed_kernel(%arg0: i32, %arg1: memref<4x128xi32, #tpu.memory_space<vmem>>, %arg2: memref<128x128xf32, #tpu.memory_space<vmem>>, %arg3: memref<1x128xf32, #tpu.memory_space<vmem>>, %arg4: memref<128x128xf32, #tpu.memory_space<vmem>>) attributes {dimension_semantics = [#tpu.dimension_semantics<parallel>], iteration_bounds = array<i64: 1>, scalar_prefetch = 0 : i64, scratch_operands = 0 : i64, tpu.core_type = #tpu.core_type<tc>, window_params = [{transform_indices = @transform_0, window_bounds = array<i64: 4, 128>}, {pipeline_mode = #tpu.pipeline_mode<synchronous>, transform_indices = @transform_1, window_bounds = array<i64: 128, 128>}, {pipeline_mode = #tpu.pipeline_mode<synchronous>, transform_indices = @transform_2, window_bounds = array<i64: 1, 128>}, {transform_indices = @transform_3, window_bounds = array<i64: 128, 128>}]} {
    %c0 = arith.constant 0 : index
    %c0_0 = arith.constant 0 : index
    %0 = vector.load %arg1[%c0, %c0_0] : memref<4x128xi32, #tpu.memory_space<vmem>>, vector<4x128xi32>
    %1 = tpu.iota {dimensions = array<i32: 0>} : vector<128x128xi32>
    %2 = vector.extract_strided_slice %0 {offsets = [0, 0], sizes = [1, 128], strides = [1, 1]} : vector<4x128xi32> to vector<1x128xi32>
    %3 = vector.broadcast %2 : vector<1x128xi32> to vector<128x128xi32>
    %4 = arith.cmpi eq, %1, %3 : vector<128x128xi32>
    %5 = vector.extract_strided_slice %0 {offsets = [1, 0], sizes = [1, 128], strides = [1, 1]} : vector<4x128xi32> to vector<1x128xi32>
    %6 = vector.broadcast %5 : vector<1x128xi32> to vector<128x128xi32>
    %7 = arith.cmpi eq, %1, %6 : vector<128x128xi32>
    %8 = arith.ori %4, %7 : vector<128x128xi1>
    %9 = vector.extract_strided_slice %0 {offsets = [2, 0], sizes = [1, 128], strides = [1, 1]} : vector<4x128xi32> to vector<1x128xi32>
    %10 = vector.broadcast %9 : vector<1x128xi32> to vector<128x128xi32>
    %11 = arith.cmpi eq, %1, %10 : vector<128x128xi32>
    %12 = arith.ori %8, %11 : vector<128x128xi1>
    %13 = vector.extract_strided_slice %0 {offsets = [3, 0], sizes = [1, 128], strides = [1, 1]} : vector<4x128xi32> to vector<1x128xi32>
    %14 = vector.broadcast %13 : vector<1x128xi32> to vector<128x128xi32>
    %15 = arith.cmpi eq, %1, %14 : vector<128x128xi32>
    %16 = arith.ori %12, %15 : vector<128x128xi1>
    %17 = arith.extui %16 : vector<128x128xi1> to vector<128x128xi32>
    %18 = arith.sitofp %17 : vector<128x128xi32> to vector<128x128xf32>
    %19 = tpu.transpose %18, [1, 0] : vector<128x128xf32> -> vector<128x128xf32>
    %c0_1 = arith.constant 0 : index
    %c0_2 = arith.constant 0 : index
    %20 = vector.load %arg2[%c0_1, %c0_2] : memref<128x128xf32, #tpu.memory_space<vmem>>, vector<128x128xf32>
    %cst = arith.constant dense<0.000000e+00> : vector<128x128xf32>
    %21 = tpu.matmul %19, %20, %cst {dimension_numbers = #tpu.dot_dimension_numbers<[1], [0], [0], [1], [0, 0, 1, 1], [], []>} : vector<128x128xf32>, vector<128x128xf32>, vector<128x128xf32> -> vector<128x128xf32>
    %c0_3 = arith.constant 0 : index
    %c0_4 = arith.constant 0 : index
    %22 = vector.load %arg3[%c0_3, %c0_4] : memref<1x128xf32, #tpu.memory_space<vmem>>, vector<1x128xf32>
    %23 = vector.broadcast %22 : vector<1x128xf32> to vector<128x128xf32>
    %24 = arith.addf %21, %23 : vector<128x128xf32>
    %c0_5 = arith.constant 0 : index
    %c0_6 = arith.constant 0 : index
    %25 = vector.load %arg4[%c0_5, %c0_6] : memref<128x128xf32, #tpu.memory_space<vmem>>, vector<128x128xf32>
    tpu.vector_store %arg4[%c0_5, %c0_6], %24 {strides = array<i32>} : memref<128x128xf32, #tpu.memory_space<vmem>>, vector<128x128xf32>,
    return
  }
  func.func @transform_0(%arg0: i32) -> (i32, i32) {
    %c0_i32 = arith.constant 0 : i32
    %c0_i32_0 = arith.constant 0 : i32
    return %c0_i32, %arg0 : i32, i32
  }
  func.func @transform_1(%arg0: i32) -> (i32, i32) {
    %c0_i32 = arith.constant 0 : i32
    %c0_i32_0 = arith.constant 0 : i32
    %c0_i32_1 = arith.constant 0 : i32
    return %c0_i32, %c0_i32_0 : i32, i32
  }
  func.func @transform_2(%arg0: i32) -> (i32, i32) {
    %c0_i32 = arith.constant 0 : i32
    %c0_i32_0 = arith.constant 0 : i32
    %c0_i32_1 = arith.constant 0 : i32
    return %c0_i32, %c0_i32_0 : i32, i32
  }
  func.func @transform_3(%arg0: i32) -> (i32, i32) {
    %c0_i32 = arith.constant 0 : i32
    %c0_i32_0 = arith.constant 0 : i32
    return %arg0, %c0_i32 : i32, i32
  }
}

</mosaic_0001>

<llo_original>
// kernel: tpu_custom_call.1
$region0: #{tpu_custom_call.1}
  #allocation0 [shape = 'u32[]', space=smem, size = 0x4, offset = 0x4, fixed_abs, tag = 'smem constant byte address 0x4 - core index']
  #allocation1 [shape = 'u32[72,128]{1,0:T(1,128)}', space=vmem, size = 0x9000, scoped, tag = 'internal scratch']
  %s0 = inlined_call_operand.hbm [shape: s32[4,128], index: 0, kind: input, shape index: {}]
  %s1 = inlined_call_operand.hbm [shape: f32[128,128], index: 1, kind: input, shape index: {}]
  %s2 = inlined_call_operand.vmem [shape: f32[1,128], index: 2, kind: input, shape index: {}]
  %s3 = inlined_call_operand.hbm [shape: f32[128,128], index: 3, kind: output, shape index: {}]
  %s4 = sld [smem:[#allocation0]]
  $region30: #{tpu_custom_call.1} parent=0
    _
  %s6 = ssub.s32 1, %s4
  %s7 = scalar_select 0, %s6, %s4
  $region1: #{tpu_custom_call.1} parent=0
    #allocation2 [shape = 'u8[2048]{0}', space=vmem, size = 0x800, scoped, tag = 'input window, operand 0, single buffered']
    #allocation3 [shape = 's32[1]{0}', space=sflag, size = 0x4, scoped, tag = 'scoped memory for tpu_custom_call.1']
    #allocation4 [shape = 's32[1]{0}', space=sflag, size = 0x4, scoped, tag = 'scoped memory for tpu_custom_call.1']
    #allocation5 [shape = 'u8[65536]{0}', space=vmem, size = 0x10000, scoped, tag = 'input window, operand 1, single buffered']
    #allocation6 [shape = 's32[1]{0}', space=sflag, size = 0x4, scoped, tag = 'scoped memory for tpu_custom_call.1']
    #allocation7 [shape = 'u8[65536]{0}', space=vmem, size = 0x10000, scoped, tag = 'output window, operand 0, single buffered']
    %8 = vsyncpa [#allocation3], 0
    %9 = vsyncpa [#allocation6], 0
    %10 = vsyncpa [#allocation4], 0
    // Predicated region
    $region2: #{tpu_custom_call.1} parent=1 // pred_check
      _
    $region3: #{tpu_custom_call.1} parent=1 // pred_check_branch
      %12 = sbr.rel (0) target = $region5
    $region4: #{tpu_custom_call.1} parent=1 // pred_region
      %14 = vsyncadd [#allocation3], 0
      %s16 = sshll.u32 %s0, 4
      %s17 = int_to_ptr.hbm [resolvable:$true] %s16
      %s18 = sshll.u32 [#allocation2], 4
      %s19 = int_to_ptr.vmem [resolvable:$true] %s18
      %21 = dma.hbm_to_vmem [thread:$0]  %s17, 64, %s19, [#allocation3]
    $region5: #{tpu_custom_call.1} parent=1 // pred_fallthru
      _
    // Predicated region
    $region6: #{tpu_custom_call.1} parent=1 // pred_check
      _
    $region7: #{tpu_custom_call.1} parent=1 // pred_check_branch
      %23 = sbr.rel (0) target = $region9
    $region8: #{tpu_custom_call.1} parent=1 // pred_region
      %25 = vsyncadd [#allocation6], 0
      %s26 = sshll.u32 %s1, 4
      %s27 = int_to_ptr.hbm [resolvable:$true] %s26
      %s28 = sshll.u32 [#allocation5], 4
      %s29 = int_to_ptr.vmem [resolvable:$true] %s28
      %34 = dma.hbm_to_vmem [thread:$0]  %s27, 2048, %s29, [#allocation6], 128, 128, 8
    $region9: #{tpu_custom_call.1} parent=1 // pred_fallthru
      _
    // Predicated region
    $region10: #{tpu_custom_call.1} parent=1 // pred_check
      _
    $region11: #{tpu_custom_call.1} parent=1 // pred_check_branch
      %36 = sbr.rel (0) target = $region13
    $region12: #{tpu_custom_call.1} parent=1 // pred_region
      _
    $region13: #{tpu_custom_call.1} parent=1 // pred_fallthru
      _
    // Predicated region
    $region14: #{tpu_custom_call.1} parent=1 // pred_check
      _
    $region15: #{tpu_custom_call.1} parent=1 // pred_check_branch
      %38 = sbr.rel (0) target = $region17
    $region16: #{tpu_custom_call.1} parent=1 // pred_region
      %40 = dma.done [#allocation3], 64
    $region17: #{tpu_custom_call.1} parent=1 // pred_fallthru
      _
    // Predicated region
    $region18: #{tpu_custom_call.1} parent=1 // pred_check
      _
    $region19: #{tpu_custom_call.1} parent=1 // pred_check_branch
      %42 = sbr.rel (0) target = $region21
    $region20: #{tpu_custom_call.1} parent=1 // pred_region
      %44 = dma.done [#allocation6], 2048
    $region21: #{tpu_custom_call.1} parent=1 // pred_fallthru
      _
    %v45 = vld [vmem:[#allocation2] sm:$0xf]
    %v46 = vlaneseq
    %v47 = vshrl.u32 %v46, 7
    %v48 = vadd.s32 %v47, 8
    %v49 = vadd.s32 %v47, 16
    %v50 = vadd.s32 %v47, 24
    %v51 = vadd.s32 %v47, 32
    %v52 = vadd.s32 %v47, 40
    %v53 = vadd.s32 %v47, 48
    %v54 = vadd.s32 %v47, 56
    %v55 = vadd.s32 %v47, 64
    %v56 = vadd.s32 %v47, 72
    %v57 = vadd.s32 %v47, 80
    %v58 = vadd.s32 %v47, 88
    %v59 = vadd.s32 %v47, 96
    %v60 = vadd.s32 %v47, 104
    %v61 = vadd.s32 %v47, 112
    %v62 = vadd.s32 %v47, 120
    %v63 = vperm.slane %v45, 0
    %vm64 = vcmp.eq.s32.totalorder %v47, %v63
    %vm65 = vcmp.eq.s32.totalorder %v48, %v63
    %vm66 = vcmp.eq.s32.totalorder %v49, %v63
    %vm67 = vcmp.eq.s32.totalorder %v50, %v63
    %vm68 = vcmp.eq.s32.totalorder %v51, %v63
    %vm69 = vcmp.eq.s32.totalorder %v52, %v63
    %vm70 = vcmp.eq.s32.totalorder %v53, %v63
    %vm71 = vcmp.eq.s32.totalorder %v54, %v63
    %vm72 = vcmp.eq.s32.totalorder %v55, %v63
    %vm73 = vcmp.eq.s32.totalorder %v56, %v63
    %vm74 = vcmp.eq.s32.totalorder %v57, %v63
    %vm75 = vcmp.eq.s32.totalorder %v58, %v63
    %vm76 = vcmp.eq.s32.totalorder %v59, %v63
    %vm77 = vcmp.eq.s32.totalorder %v60, %v63
    %vm78 = vcmp.eq.s32.totalorder %v61, %v63
    %vm79 = vcmp.eq.s32.totalorder %v62, %v63
    %v80 = vperm.slane %v45, 1
    %vm81 = vcmp.eq.s32.totalorder %v47, %v80
    %vm82 = vcmp.eq.s32.totalorder %v48, %v80
    %vm83 = vcmp.eq.s32.totalorder %v49, %v80
    %vm84 = vcmp.eq.s32.totalorder %v50, %v80
    %vm85 = vcmp.eq.s32.totalorder %v51, %v80
    %vm86 = vcmp.eq.s32.totalorder %v52, %v80
    %vm87 = vcmp.eq.s32.totalorder %v53, %v80
    %vm88 = vcmp.eq.s32.totalorder %v54, %v80
    %vm89 = vcmp.eq.s32.totalorder %v55, %v80
    %vm90 = vcmp.eq.s32.totalorder %v56, %v80
    %vm91 = vcmp.eq.s32.totalorder %v57, %v80
    %vm92 = vcmp.eq.s32.totalorder %v58, %v80
    %vm93 = vcmp.eq.s32.totalorder %v59, %v80
    %vm94 = vcmp.eq.s32.totalorder %v60, %v80
    %vm95 = vcmp.eq.s32.totalorder %v61, %v80
    %vm96 = vcmp.eq.s32.totalorder %v62, %v80
    %vm97 = vmor %vm64, %vm81
    %vm98 = vmor %vm65, %vm82
    %vm99 = vmor %vm66, %vm83
    %vm100 = vmor %vm67, %vm84
    %vm101 = vmor %vm68, %vm85
    %vm102 = vmor %vm69, %vm86
    %vm103 = vmor %vm70, %vm87
    %vm104 = vmor %vm71, %vm88
    %vm105 = vmor %vm72, %vm89
    %vm106 = vmor %vm73, %vm90
    %vm107 = vmor %vm74, %vm91
    %vm108 = vmor %vm75, %vm92
    %vm109 = vmor %vm76, %vm93
    %vm110 = vmor %vm77, %vm94
    %vm111 = vmor %vm78, %vm95
    %vm112 = vmor %vm79, %vm96
    %v113 = vperm.slane %v45, 2
    %vm114 = vcmp.eq.s32.totalorder %v47, %v113
    %vm115 = vcmp.eq.s32.totalorder %v48, %v113
    %vm116 = vcmp.eq.s32.totalorder %v49, %v113
    %vm117 = vcmp.eq.s32.totalorder %v50, %v113
    %vm118 = vcmp.eq.s32.totalorder %v51, %v113
    %vm119 = vcmp.eq.s32.totalorder %v52, %v113
    %vm120 = vcmp.eq.s32.totalorder %v53, %v113
    %vm121 = vcmp.eq.s32.totalorder %v54, %v113
    %vm122 = vcmp.eq.s32.totalorder %v55, %v113
    %vm123 = vcmp.eq.s32.totalorder %v56, %v113
    %vm124 = vcmp.eq.s32.totalorder %v57, %v113
    %vm125 = vcmp.eq.s32.totalorder %v58, %v113
    %vm126 = vcmp.eq.s32.totalorder %v59, %v113
    %vm127 = vcmp.eq.s32.totalorder %v60, %v113
    %vm128 = vcmp.eq.s32.totalorder %v61, %v113
    %vm129 = vcmp.eq.s32.totalorder %v62, %v113
    %vm130 = vmor %vm97, %vm114
    %vm131 = vmor %vm98, %vm115
    %vm132 = vmor %vm99, %vm116
    %vm133 = vmor %vm100, %vm117
    %vm134 = vmor %vm101, %vm118
    %vm135 = vmor %vm102, %vm119
    %vm136 = vmor %vm103, %vm120
    %vm137 = vmor %vm104, %vm121
    %vm138 = vmor %vm105, %vm122
    %vm139 = vmor %vm106, %vm123
    %vm140 = vmor %vm107, %vm124
    %vm141 = vmor %vm108, %vm125
    %vm142 = vmor %vm109, %vm126
    %vm143 = vmor %vm110, %vm127
    %vm144 = vmor %vm111, %vm128
    %vm145 = vmor %vm112, %vm129
    %v146 = vperm.slane %v45, 3
    %vm147 = vcmp.eq.s32.totalorder %v47, %v146
    %vm148 = vcmp.eq.s32.totalorder %v48, %v146
    %vm149 = vcmp.eq.s32.totalorder %v49, %v146
    %vm150 = vcmp.eq.s32.totalorder %v50, %v146
    %vm151 = vcmp.eq.s32.totalorder %v51, %v146
    %vm152 = vcmp.eq.s32.totalorder %v52, %v146
    %vm153 = vcmp.eq.s32.totalorder %v53, %v146
    %vm154 = vcmp.eq.s32.totalorder %v54, %v146
    %vm155 = vcmp.eq.s32.totalorder %v55, %v146
    %vm156 = vcmp.eq.s32.totalorder %v56, %v146
    %vm157 = vcmp.eq.s32.totalorder %v57, %v146
    %vm158 = vcmp.eq.s32.totalorder %v58, %v146
    %vm159 = vcmp.eq.s32.totalorder %v59, %v146
    %vm160 = vcmp.eq.s32.totalorder %v60, %v146
    %vm161 = vcmp.eq.s32.totalorder %v61, %v146
    %vm162 = vcmp.eq.s32.totalorder %v62, %v146
    %vm163 = vmor %vm130, %vm147
    %vm164 = vmor %vm131, %vm148
    %vm165 = vmor %vm132, %vm149
    %vm166 = vmor %vm133, %vm150
    %vm167 = vmor %vm134, %vm151
    %vm168 = vmor %vm135, %vm152
    %vm169 = vmor %vm136, %vm153
    %vm170 = vmor %vm137, %vm154
    %vm171 = vmor %vm138, %vm155
    %vm172 = vmor %vm139, %vm156
    %vm173 = vmor %vm140, %vm157
    %vm174 = vmor %vm141, %vm158
    %vm175 = vmor %vm142, %vm159
    %vm176 = vmor %vm143, %vm160
    %vm177 = vmor %vm144, %vm161
    %vm178 = vmor %vm145, %vm162
    %v179 = vsel %vm163, 1, 0
    %v180 = vsel %vm164, 1, 0
    %v181 = vsel %vm165, 1, 0
    %v182 = vsel %vm166, 1, 0
    %v183 = vsel %vm167, 1, 0
    %v184 = vsel %vm168, 1, 0
    %v185 = vsel %vm169, 1, 0
    %v186 = vsel %vm170, 1, 0
    %v187 = vsel %vm171, 1, 0
    %v188 = vsel %vm172, 1, 0
    %v189 = vsel %vm173, 1, 0
    %v190 = vsel %vm174, 1, 0
    %v191 = vsel %vm175, 1, 0
    %v192 = vsel %vm176, 1, 0
    %v193 = vsel %vm177, 1, 0
    %v194 = vsel %vm178, 1, 0
    %v195 = vcvt.s32.f32 %v179
    %v196 = vcvt.s32.f32 %v180
    %v197 = vcvt.s32.f32 %v181
    %v198 = vcvt.s32.f32 %v182
    %v199 = vcvt.s32.f32 %v183
    %v200 = vcvt.s32.f32 %v184
    %v201 = vcvt.s32.f32 %v185
    %v202 = vcvt.s32.f32 %v186
    %v203 = vcvt.s32.f32 %v187
    %v204 = vcvt.s32.f32 %v188
    %v205 = vcvt.s32.f32 %v189
    %v206 = vcvt.s32.f32 %v190
    %v207 = vcvt.s32.f32 %v191
    %v208 = vcvt.s32.f32 %v192
    %v209 = vcvt.s32.f32 %v193
    %v210 = vcvt.s32.f32 %v194
    %211 = vxpose.xlu0.b32.start [1/16] %v195, 128
    %212 = vxpose.xlu0.b32.cont [2/16] %v196, 128
    %213 = vxpose.xlu0.b32.cont [3/16] %v197, 128
    %214 = vxpose.xlu0.b32.cont [4/16] %v198, 128
    %215 = vxpose.xlu0.b32.cont [5/16] %v199, 128
    %216 = vxpose.xlu0.b32.cont [6/16] %v200, 128
    %217 = vxpose.xlu0.b32.cont [7/16] %v201, 128
    %218 = vxpose.xlu0.b32.cont [8/16] %v202, 128
    %219 = vxpose.xlu0.b32.cont [9/16] %v203, 128
    %220 = vxpose.xlu0.b32.cont [10/16] %v204, 128
    %221 = vxpose.xlu0.b32.cont [11/16] %v205, 128
    %222 = vxpose.xlu0.b32.cont [12/16] %v206, 128
    %223 = vxpose.xlu0.b32.cont [13/16] %v207, 128
    %224 = vxpose.xlu0.b32.cont [14/16] %v208, 128
    %225 = vxpose.xlu0.b32.cont [15/16] %v209, 128
    %226 = vxpose.xlu0.b32.end [16/16] %v210, 128
    %v227 = vpop.trf.xlu0
    %v228 = vpop.trf.xlu0
    %v229 = vpop.trf.xlu0
    %v230 = vpop.trf.xlu0
    %v231 = vpop.trf.xlu0
    %v232 = vpop.trf.xlu0
    %v233 = vpop.trf.xlu0
    %v234 = vpop.trf.xlu0
    %v235 = vpop.trf.xlu0
    %v236 = vpop.trf.xlu0
    %v237 = vpop.trf.xlu0
    %v238 = vpop.trf.xlu0
    %v239 = vpop.trf.xlu0
    %v240 = vpop.trf.xlu0
    %v241 = vpop.trf.xlu0
    %v242 = vpop.trf.xlu0
    %v243 = vld [vmem:[#allocation5] sm:$0xff]
    %v244 = vld [vmem:[#allocation5 + $0x8] sm:$0xff]
    %v245 = vld [vmem:[#allocation5 + $0x10] sm:$0xff]
    %v246 = vld [vmem:[#allocation5 + $0x18] sm:$0xff]
    %v247 = vld [vmem:[#allocation5 + $0x20] sm:$0xff]
    %v248 = vld [vmem:[#allocation5 + $0x28] sm:$0xff]
    %v249 = vld [vmem:[#allocation5 + $0x30] sm:$0xff]
    %v250 = vld [vmem:[#allocation5 + $0x38] sm:$0xff]
    %v251 = vld [vmem:[#allocation5 + $0x40] sm:$0xff]
    %v252 = vld [vmem:[#allocation5 + $0x48] sm:$0xff]
    %v253 = vld [vmem:[#allocation5 + $0x50] sm:$0xff]
    %v254 = vld [vmem:[#allocation5 + $0x58] sm:$0xff]
    %v255 = vld [vmem:[#allocation5 + $0x60] sm:$0xff]
    %v256 = vld [vmem:[#allocation5 + $0x68] sm:$0xff]
    %v257 = vld [vmem:[#allocation5 + $0x70] sm:$0xff]
    %v258 = vld [vmem:[#allocation5 + $0x78] sm:$0xff]
    %v259 = vld [vmem:[%s2] sm:$0x1]
    %v261 = vperm.slane %v259, 0
    %263 = vmatpush.msra.mxu0 %v258
    %264 = vmatpush.msra.mxu0 %v257
    %265 = vmatpush.msra.mxu0 %v256
    %266 = vmatpush.msra.mxu0 %v255
    %267 = vmatpush.msra.mxu0 %v254
    %268 = vmatpush.msra.mxu0 %v253
    %269 = vmatpush.msra.mxu0 %v252
    %270 = vmatpush.msra.mxu0 %v251
    %271 = vmatpush.msra.mxu0 %v250
    %272 = vmatpush.msra.mxu0 %v249
    %273 = vmatpush.msra.mxu0 %v248
    %274 = vmatpush.msra.mxu0 %v247
    %275 = vmatpush.msra.mxu0 %v246
    %276 = vmatpush.msra.mxu0 %v245
    %277 = vmatpush.msra.mxu0 %v244
    %278 = vmatpush.msra.mxu0 %v243
    %279 = vmatmul.f32.gmra.mxu0 %v227
    %v280 = vpop.f32.mrf.mxu0
    %v281 = vadd.f32 %v261, %v280
    %282 = vmatmul.f32.gmra.mxu0 %v228
    %v283 = vpop.f32.mrf.mxu0
    %v284 = vadd.f32 %v261, %v283
    %285 = vmatmul.f32.gmra.mxu0 %v229
    %v286 = vpop.f32.mrf.mxu0
    %v287 = vadd.f32 %v261, %v286
    %288 = vmatmul.f32.gmra.mxu0 %v230
    %v289 = vpop.f32.mrf.mxu0
    %v290 = vadd.f32 %v261, %v289
    %291 = vmatmul.f32.gmra.mxu0 %v231
    %v292 = vpop.f32.mrf.mxu0
    %v293 = vadd.f32 %v261, %v292
    %294 = vmatmul.f32.gmra.mxu0 %v232
    %v295 = vpop.f32.mrf.mxu0
    %v296 = vadd.f32 %v261, %v295
    %297 = vmatmul.f32.gmra.mxu0 %v233
    %v298 = vpop.f32.mrf.mxu0
    %v299 = vadd.f32 %v261, %v298
    %300 = vmatmul.f32.gmra.mxu0 %v234
    %v301 = vpop.f32.mrf.mxu0
    %v302 = vadd.f32 %v261, %v301
    %303 = vmatmul.f32.gmra.mxu0 %v235
    %v304 = vpop.f32.mrf.mxu0
    %v305 = vadd.f32 %v261, %v304
    %306 = vmatmul.f32.gmra.mxu0 %v236
    %v307 = vpop.f32.mrf.mxu0
    %v308 = vadd.f32 %v261, %v307
    %309 = vmatmul.f32.gmra.mxu0 %v237
    %v310 = vpop.f32.mrf.mxu0
    %v311 = vadd.f32 %v261, %v310
    %312 = vmatmul.f32.gmra.mxu0 %v238
    %v313 = vpop.f32.mrf.mxu0
    %v314 = vadd.f32 %v261, %v313
    %315 = vmatmul.f32.gmra.mxu0 %v239
    %v316 = vpop.f32.mrf.mxu0
    %v317 = vadd.f32 %v261, %v316
    %318 = vmatmul.f32.gmra.mxu0 %v240
    %v319 = vpop.f32.mrf.mxu0
    %v320 = vadd.f32 %v261, %v319
    %321 = vmatmul.f32.gmra.mxu0 %v241
    %v322 = vpop.f32.mrf.mxu0
    %v323 = vadd.f32 %v261, %v322
    %324 = vmatmul.f32.gmra.mxu0 %v242
    %v325 = vpop.f32.mrf.mxu0
    %v326 = vadd.f32 %v261, %v325
    %327 = vdwg.mxu0
    %328 = vst [vmem:[#allocation7] sm:$0xff] %v281
    %329 = vst [vmem:[#allocation7 + $0x8] sm:$0xff] %v284
    %330 = vst [vmem:[#allocation7 + $0x10] sm:$0xff] %v287
    %331 = vst [vmem:[#allocation7 + $0x18] sm:$0xff] %v290
    %332 = vst [vmem:[#allocation7 + $0x20] sm:$0xff] %v293
    %333 = vst [vmem:[#allocation7 + $0x28] sm:$0xff] %v296
    %334 = vst [vmem:[#allocation7 + $0x30] sm:$0xff] %v299
    %335 = vst [vmem:[#allocation7 + $0x38] sm:$0xff] %v302
    %336 = vst [vmem:[#allocation7 + $0x40] sm:$0xff] %v305
    %337 = vst [vmem:[#allocation7 + $0x48] sm:$0xff] %v308
    %338 = vst [vmem:[#allocation7 + $0x50] sm:$0xff] %v311
    %339 = vst [vmem:[#allocation7 + $0x58] sm:$0xff] %v314
    %340 = vst [vmem:[#allocation7 + $0x60] sm:$0xff] %v317
    %341 = vst [vmem:[#allocation7 + $0x68] sm:$0xff] %v320
    %342 = vst [vmem:[#allocation7 + $0x70] sm:$0xff] %v323
    %343 = vst [vmem:[#allocation7 + $0x78] sm:$0xff] %v326
    // Predicated region
    $region22: #{tpu_custom_call.1} parent=1 // pred_check
      _
    $region23: #{tpu_custom_call.1} parent=1 // pred_check_branch
      %345 = sbr.rel (0) target = $region25
    $region24: #{tpu_custom_call.1} parent=1 // pred_region
      %347 = vsyncadd [#allocation4], 0
      %s348 = sshll.u32 [#allocation7], 4
      %s349 = int_to_ptr.vmem [resolvable:$true] %s348
      %s350 = sshll.u32 %s3, 4
      %s351 = int_to_ptr.hbm [resolvable:$true] %s350
      %356 = dma.vmem_to_hbm [thread:$0]  %s349, 2048, %s351, [#allocation4], 128, 128, 8
    $region25: #{tpu_custom_call.1} parent=1 // pred_fallthru
      _
    // Predicated region
    $region26: #{tpu_custom_call.1} parent=1 // pred_check
      _
    $region27: #{tpu_custom_call.1} parent=1 // pred_check_branch
      %358 = sbr.rel (0) target = $region29
    $region28: #{tpu_custom_call.1} parent=1 // pred_region
      %360 = dma.done [#allocation4], 2048
    $region29: #{tpu_custom_call.1} parent=1 // pred_fallthru
      _
    %361 = vsyncpa [#allocation3], 1
    %362 = vsyncpa [#allocation6], 1
    %363 = vsyncpa [#allocation4], 1

</llo_original>
